<compile_context>
chip_gen: v5e
topology: v5e:2x2
jax: 0.10.0
libtpu: 0.0.40
codegen_flags: <defaults>
</compile_context>

<pallas_src>
import jax
import jax.numpy as jnp
from jax.experimental import pallas as pl
from jax.experimental.pallas import tpu as pltpu

CLAP_DIM = 512  # asserted in the module: output_dim == 512


def _round_up(x: int, m: int) -> int:
    return (x + m - 1) // m * m


def _clap_proj_kernel(x_ref, w_ref, b_ref, o_ref, acc_ref):
    # Grid = (D tiles [parallel], K tiles [arbitrary, reduction over T]).
    # x_ref: (BP, TK) mono tile   w_ref: (TK, TD)   b_ref: (1, TD)
    # o_ref: (BP, TD)             acc_ref: (BP, TD) f32 VMEM accumulator
    k = pl.program_id(1)

    @pl.when(k == 0)
    def _():
        acc_ref[...] = jnp.zeros_like(acc_ref)

    # MXU: accumulate the partial projection for this K slice in f32.
    acc_ref[...] += jnp.dot(
        x_ref[...], w_ref[...], preferred_element_type=jnp.float32
    )

    @pl.when(k == pl.num_programs(1) - 1)
    def _():
        # Bias is added exactly once, on the final reduction step.
        o_ref[...] = (acc_ref[...] + b_ref[...]).astype(o_ref.dtype)


def _clap_embed(mono, w, b, *, tk=4096, td=256, compute_dtype=jnp.float32):
    """mono: (B, T) f32, w: (T, D), b: (1, D) or (D,) -> (B, D) f32."""
    B, T = mono.shape
    Tw, D = w.shape
    assert Tw == T, "weight rows must match the number of audio samples"
    assert D % 128 == 0, "embedding dim must be lane-aligned (multiple of 128)"

    td = min(td, D)
    assert D % td == 0 and td % 128 == 0
    tk = min(tk, _round_up(T, 128))
    assert tk % 128 == 0

    BP = _round_up(B, 8)          # sublane-aligned rows -> unmasked stores
    TP = _round_up(T, tk)         # pad reduction dim to a whole number of tiles
    nd, nk = D // td, TP // tk

    # Zero-pad (padded mono rows/cols contribute nothing to the dot).
    mono_c = mono.astype(compute_dtype)
    if BP != B or TP != T:
        mono_c = jnp.zeros((BP, TP), compute_dtype).at[:B, :T].set(mono_c)
    w_c = w.astype(compute_dtype)
    if TP != T:
        w_c = jnp.zeros((TP, D), compute_dtype).at[:T, :].set(w_c)
    b2 = jnp.reshape(b, (1, D)).astype(jnp.float32)

    itemsize = jnp.dtype(compute_dtype).itemsize
    cost = pl.CostEstimate(
        flops=2 * BP * TP * D,
        transcendentals=0,
        bytes_accessed=int(
            BP * TP * itemsize * nd      # mono re-read per D tile
            + TP * D * itemsize          # full weight streamed once
            + D * 4                      # bias
            + BP * D * 4                 # output
        ),
    )

    emb = pl.pallas_call(
        _clap_proj_kernel,
        out_shape=jax.ShapeDtypeStruct((BP, D), jnp.float32),
        grid_spec=pltpu.PrefetchScalarGridSpec(
            num_scalar_prefetch=0,
            grid=(nd, nk),
            in_specs=[
                pl.BlockSpec((BP, tk), lambda d, k: (0, k)),
                # Dominant stream: W tiles, auto double-buffered by Pallas.
                # (pipeline_mode=pl.Buffered(3) is a sweepable knob here.)
                pl.BlockSpec((tk, td), lambda d, k: (k, d)),
                pl.BlockSpec((1, td), lambda d, k: (0, d)),
            ],
            out_specs=pl.BlockSpec((BP, td), lambda d, k: (0, d)),
            scratch_shapes=[pltpu.VMEM((BP, td), jnp.float32)],
        ),
        compiler_params=pltpu.CompilerParams(
            dimension_semantics=("parallel", "arbitrary"),
        ),
        cost_estimate=cost,
    )(mono_c, w_c, b2)

    return emb[:B]


def clap_audio_conditioner(audios, w, b, *, tk=4096, td=256,
                           compute_dtype=jnp.float32):
    """Returns [audio_embedding (B, 1, 512) f32, mask ones (B, 1) f32]."""
    if isinstance(audios, (list, tuple)):
        audios = jnp.concatenate(audios, axis=0)
    audios = audios.astype(jnp.float32)  # mono_audios.float()
    # audios.mean(dim=1): tiny (B*C*T) op done in the wrapper so the kernel
    # streams lane-dense (BP, TK) tiles and the mixdown is not an in-kernel
    # XLU sublane reduce nor recomputed per D tile.
    mono = jnp.mean(audios, axis=1)

    emb = _clap_embed(mono, w, b, tk=tk, td=td, compute_dtype=compute_dtype)

    audio_embedding = emb[:, None, :]          # unsqueeze(1) -> (B, 1, 512)
    # proj_out is nn.Identity (dim == output_dim, project_out=False)
    mask = jnp.ones((audio_embedding.shape[0], 1), dtype=jnp.float32)
    return [audio_embedding, mask]


if __name__ == "__main__":
    key = jax.random.PRNGKey(0)
    k_audio, k_w, k_b = jax.random.split(key, 3)

    # Small deterministic example: batch=2, stereo (C=2), T=4096 samples.
    # tk=1024 / td=256 -> grid=(2, 4): exercises the parallel-D + reduction-K
    # pipeline structure even at this small size.
    B, C, T = 2, 2, 4096
    audios = jax.random.normal(k_audio, (B, C, T), dtype=jnp.float32)

    # Deterministic surrogate CLAP-audio-branch parameters (synthetic).
    w = jax.random.normal(k_w, (T, CLAP_DIM), dtype=jnp.float32) * 0.02
    b = jax.random.normal(k_b, (1, CLAP_DIM), dtype=jnp.float32) * 0.01

    emb, mask = clap_audio_conditioner(audios, w, b, tk=1024, td=256)
    jax.block_until_ready(emb)
    jax.block_until_ready(mask)

    assert emb.shape == (B, 1, CLAP_DIM) and emb.dtype == jnp.float32
    assert mask.shape == (B, 1) and mask.dtype == jnp.float32

    # Pure-JAX reference check of the surrogate math.
    ref = jnp.mean(audios, axis=1) @ w + b
    assert jnp.allclose(emb[:, 0, :], ref, atol=1e-4, rtol=1e-4)

    print("KERNEL_OK")
</pallas_src>

<mosaic_0001>
module attributes {stable_mosaic.version = 11 : i64} {
  func.func @_clap_proj_kernel(%arg0: i32, %arg1: i32, %arg2: memref<8x1024xf32, #tpu.memory_space<vmem>>, %arg3: memref<1024x256xf32, #tpu.memory_space<vmem>>, %arg4: memref<1x256xf32, #tpu.memory_space<vmem>>, %arg5: memref<8x256xf32, #tpu.memory_space<vmem>>, %arg6: memref<8x256xf32, #tpu.memory_space<vmem>>) attributes {dimension_semantics = [#tpu.dimension_semantics<parallel>, #tpu.dimension_semantics<arbitrary>], iteration_bounds = array<i64: 2, 4>, scalar_prefetch = 0 : i64, scratch_operands = 1 : i64, tpu.core_type = #tpu.core_type<tc>, window_params = [{transform_indices = @transform_0, window_bounds = array<i64: 8, 1024>}, {transform_indices = @transform_1, window_bounds = array<i64: 1024, 256>}, {transform_indices = @transform_2, window_bounds = array<i64: 1, 256>}, {transform_indices = @transform_3, window_bounds = array<i64: 8, 256>}]} {
    %c0_i32 = arith.constant 0 : i32
    %0 = arith.cmpi eq, %arg1, %c0_i32 : i32
    %1 = arith.extui %0 : i1 to i32
    %c0_i32_0 = arith.constant 0 : i32
    %2 = arith.cmpi ne, %1, %c0_i32_0 : i32
    scf.if %2 {
      %cst_9 = arith.constant 0.000000e+00 : f32
      %12 = vector.broadcast %cst_9 : f32 to vector<8x256xf32>
      %c0_10 = arith.constant 0 : index
      %c0_11 = arith.constant 0 : index
      %13 = vector.load %arg6[%c0_10, %c0_11] : memref<8x256xf32, #tpu.memory_space<vmem>>, vector<8x256xf32>
      tpu.vector_store %arg6[%c0_10, %c0_11], %12 {strides = array<i32>} : memref<8x256xf32, #tpu.memory_space<vmem>>, vector<8x256xf32>,
    } else {
    }
    %c0 = arith.constant 0 : index
    %c0_1 = arith.constant 0 : index
    %3 = vector.load %arg6[%c0, %c0_1] : memref<8x256xf32, #tpu.memory_space<vmem>>, vector<8x256xf32>
    %c0_2 = arith.constant 0 : index
    %c0_3 = arith.constant 0 : index
    %4 = vector.load %arg2[%c0_2, %c0_3] : memref<8x1024xf32, #tpu.memory_space<vmem>>, vector<8x1024xf32>
    %c0_4 = arith.constant 0 : index
    %c0_5 = arith.constant 0 : index
    %5 = vector.load %arg3[%c0_4, %c0_5] : memref<1024x256xf32, #tpu.memory_space<vmem>>, vector<1024x256xf32>
    %cst = arith.constant dense<0.000000e+00> : vector<8x256xf32>
    %6 = tpu.matmul %4, %5, %cst {dimension_numbers = #tpu.dot_dimension_numbers<[1], [0], [0], [1], [0, 0, 1, 1], [], []>} : vector<8x1024xf32>, vector<1024x256xf32>, vector<8x256xf32> -> vector<8x256xf32>
    %7 = arith.addf %3, %6 : vector<8x256xf32>
    %c0_6 = arith.constant 0 : index
    %c0_7 = arith.constant 0 : index
    %8 = vector.load %arg6[%c0_6, %c0_7] : memref<8x256xf32, #tpu.memory_space<vmem>>, vector<8x256xf32>
    tpu.vector_store %arg6[%c0_6, %c0_7], %7 {strides = array<i32>} : memref<8x256xf32, #tpu.memory_space<vmem>>, vector<8x256xf32>,
    %c3_i32 = arith.constant 3 : i32
    %9 = arith.cmpi eq, %arg1, %c3_i32 : i32
    %10 = arith.extui %9 : i1 to i32
    %c0_i32_8 = arith.constant 0 : i32
    %11 = arith.cmpi ne, %10, %c0_i32_8 : i32
    scf.if %11 {
      %c0_9 = arith.constant 0 : index
      %c0_10 = arith.constant 0 : index
      %12 = vector.load %arg6[%c0_9, %c0_10] : memref<8x256xf32, #tpu.memory_space<vmem>>, vector<8x256xf32>
      %c0_11 = arith.constant 0 : index
      %c0_12 = arith.constant 0 : index
      %13 = vector.load %arg4[%c0_11, %c0_12] : memref<1x256xf32, #tpu.memory_space<vmem>>, vector<1x256xf32>
      %14 = vector.broadcast %13 : vector<1x256xf32> to vector<8x256xf32>
      %15 = arith.addf %12, %14 : vector<8x256xf32>
      %c0_13 = arith.constant 0 : index
      %c0_14 = arith.constant 0 : index
      %16 = vector.load %arg5[%c0_13, %c0_14] : memref<8x256xf32, #tpu.memory_space<vmem>>, vector<8x256xf32>
      tpu.vector_store %arg5[%c0_13, %c0_14], %15 {strides = array<i32>} : memref<8x256xf32, #tpu.memory_space<vmem>>, vector<8x256xf32>,
    } else {
    }
    return
  }
  func.func @transform_0(%arg0: i32, %arg1: i32) -> (i32, i32) {
    %c0_i32 = arith.constant 0 : i32
    %c0_i32_0 = arith.constant 0 : i32
    return %c0_i32, %arg1 : i32, i32
  }
  func.func @transform_1(%arg0: i32, %arg1: i32) -> (i32, i32) {
    %c0_i32 = arith.constant 0 : i32
    return %arg1, %arg0 : i32, i32
  }
  func.func @transform_2(%arg0: i32, %arg1: i32) -> (i32, i32) {
    %c0_i32 = arith.constant 0 : i32
    %c0_i32_0 = arith.constant 0 : i32
    return %c0_i32, %arg0 : i32, i32
  }
  func.func @transform_3(%arg0: i32, %arg1: i32) -> (i32, i32) {
    %c0_i32 = arith.constant 0 : i32
    %c0_i32_0 = arith.constant 0 : i32
    return %c0_i32, %arg0 : i32, i32
  }
}

</mosaic_0001>

<llo_original>
// kernel: tpu_custom_call.1
$region0: #{tpu_custom_call.1}
  #allocation0 [shape = 'u32[]', space=smem, size = 0x4, offset = 0x4, fixed_abs, tag = 'smem constant byte address 0x4 - core index']
  #allocation1 [shape = 'u32[72,128]{1,0:T(1,128)}', space=vmem, size = 0x9000, scoped, tag = 'internal scratch']
  #allocation2 [shape = 'f32[8,256]{1,0:T(8,128)}', space=vmem, size = 0x2000, scoped, tag = 'scratch operand']
  %s0 = inlined_call_operand.hbm [shape: f32[8,4096], index: 0, kind: input, shape index: {}]
  %s1 = inlined_call_operand.hbm [shape: f32[4096,512], index: 1, kind: input, shape index: {}]
  %s2 = inlined_call_operand.hbm [shape: f32[1,512], index: 2, kind: input, shape index: {}]
  %s3 = inlined_call_operand.hbm [shape: f32[8,512], index: 3, kind: output, shape index: {}]
  %s4 = sld [smem:[#allocation0]]
  $region65: #{tpu_custom_call.1} parent=0
    _
  %s6 = ssub.s32 1, %s4
  %s7 = scalar_select 0, %s6, %s4
  $region1: #{tpu_custom_call.1} parent=0
    #allocation3 [shape = 'u8[65536]{0}', space=vmem, size = 0x10000, scoped, tag = 'input window, operand 0']
    #allocation4 [shape = 's32[2]{0}', space=sflag, size = 0x8, scoped, tag = 'scoped memory for tpu_custom_call.1']
    #allocation5 [shape = 's32[2]{0}', space=sflag, size = 0x8, scoped, tag = 'scoped memory for tpu_custom_call.1']
    #allocation6 [shape = 'u8[2097152]{0}', space=vmem, size = 0x200000, scoped, tag = 'input window, operand 1']
    #allocation7 [shape = 's32[2]{0}', space=sflag, size = 0x8, scoped, tag = 'scoped memory for tpu_custom_call.1']
    #allocation8 [shape = 'u8[2048]{0}', space=vmem, size = 0x800, scoped, tag = 'input window, operand 2']
    #allocation9 [shape = 'u8[16384]{0}', space=vmem, size = 0x4000, scoped, tag = 'output window, operand 0']
    %8 = vsyncpa [#allocation4], 0
    %s9 = scalar_lea.sflag [#allocation4], 1
    %10 = vsyncpa %s9, 0
    %11 = vsyncpa [#allocation7], 0
    %s12 = scalar_lea.sflag [#allocation7], 1
    %13 = vsyncpa %s12, 0
    %14 = vsyncpa [#allocation5], 0
    %s15 = scalar_lea.sflag [#allocation5], 1
    %16 = vsyncpa %s15, 0
    loop: start=0, step=1, limit=10
    $region2: #{tpu_custom_call.1} parent=1 // loop_pre_header
      _
    $region3: #{tpu_custom_call.1} parent=1 // loop_header
      %s18 = sphi 0, %s22
      %p19 = scmp.ge.s32.totalorder %s18, 10
      %s25 = sphi 0, %s37
      %s26 = sphi 0, %s33
      %s27 = sphi 0, %s25
      %s28 = sphi 0, %s26
      %s29 = sphi 0, %s27
      %s30 = sphi 0, %s28
      %s40 = sphi 0, %s42
      %s43 = sphi 0, %s40
      %s44 = sphi 0, %s43
      %s60 = sphi 0, %s44
      %s68 = sphi 0, %s70
      %s71 = sphi 0, %s68
      %s72 = sphi 0, %s71
      %s88 = sphi 0, %s72
      %s94 = sphi 0, %s96
      %s97 = sphi 0, %s94
      %s98 = sphi 0, %s97
      %s114 = sphi 0, %s98
      %s120 = sphi 0, %s122
      %s123 = sphi 0, %s120
      %s124 = sphi 0, %s123
      %s140 = sphi 0, %s124
    $region4: #{tpu_custom_call.1} parent=1 // loop_header_branch
      %21 = sbr.rel (%p19) target = $region8
    $region5: #{tpu_custom_call.1} parent=1 // loop_body
      %s23 = ssub.s32 %s18, 1
      %s24 = ssub.s32 %s18, 2
      %s31 = sadd.s32 1, %s26
      %p32 = scmp.ge.s32.totalorder %s31, 4
      %s33 = scalar_select %p32, 0, %s31
      %s34 = sadd.s32 1, %s25
      %s35 = scalar_select %p32, %s34, %s25
      %p36 = scmp.ge.s32.totalorder %s35, 2
      %s37 = scalar_select %p36, 0, %s35
      %s38 = ssub.s32 %s26, %s33
      %p39 = scmp.eq.s32.totalorder %s38, 0
      %s41 = sadd.s32 %s40, 1
      %s42 = scalar_select %p39, %s40, %s41
      %p45 = pneg %p39
      %p46 = scmp.eq.s32.totalorder %s18, 7
      %p47 = por %p45, %p46
      %p48 = scmp.ne.s32.totalorder %s40, %s43
      %p49 = scmp.eq.s32.totalorder %s18, 0
      %p50 = por %p48, %p49
      %p51 = scmp.ne.s32.totalorder %s40, %s43
      %p52 = scmp.eq.s32.totalorder %s23, 7
      %p53 = por %p51, %p52
      %p54 = scmp.ne.s32.totalorder %s43, %s44
      %p55 = scmp.eq.s32.totalorder %s23, 0
      %p56 = por %p54, %p55
      %p57 = scmp.ne.s32.totalorder %s43, %s44
      %p58 = scmp.eq.s32.totalorder %s24, 7
      %p59 = por %p57, %p58
      %p61 = scmp.ne.s32.totalorder %s44, %s60
      %p62 = scmp.eq.s32.totalorder %s24, 0
      %p63 = por %p61, %p62
      %s64 = ssub.s32 %s26, %s33
      %s65 = ssub.s32 %s25, %s37
      %s66 = sor.u32 %s64, %s65
      %p67 = scmp.eq.s32.totalorder %s66, 0
      %s69 = sadd.s32 %s68, 1
      %s70 = scalar_select %p67, %s68, %s69
      %p73 = pneg %p67
      %p74 = scmp.eq.s32.totalorder %s18, 7
      %p75 = por %p73, %p74
      %p76 = scmp.ne.s32.totalorder %s68, %s71
      %p77 = scmp.eq.s32.totalorder %s18, 0
      %p78 = por %p76, %p77
      %p79 = scmp.ne.s32.totalorder %s68, %s71
      %p80 = scmp.eq.s32.totalorder %s23, 7
      %p81 = por %p79, %p80
      %p82 = scmp.ne.s32.totalorder %s71, %s72
      %p83 = scmp.eq.s32.totalorder %s23, 0
      %p84 = por %p82, %p83
      %p85 = scmp.ne.s32.totalorder %s71, %s72
      %p86 = scmp.eq.s32.totalorder %s24, 7
      %p87 = por %p85, %p86
      %p89 = scmp.ne.s32.totalorder %s72, %s88
      %p90 = scmp.eq.s32.totalorder %s24, 0
      %p91 = por %p89, %p90
      %s92 = ssub.s32 %s25, %s37
      %p93 = scmp.eq.s32.totalorder %s92, 0
      %s95 = sadd.s32 %s94, 1
      %s96 = scalar_select %p93, %s94, %s95
      %p99 = pneg %p93
      %p100 = scmp.eq.s32.totalorder %s18, 7
      %p101 = por %p99, %p100
      %p102 = scmp.ne.s32.totalorder %s94, %s97
      %p103 = scmp.eq.s32.totalorder %s18, 0
      %p104 = por %p102, %p103
      %p105 = scmp.ne.s32.totalorder %s94, %s97
      %p106 = scmp.eq.s32.totalorder %s23, 7
      %p107 = por %p105, %p106
      %p108 = scmp.ne.s32.totalorder %s97, %s98
      %p109 = scmp.eq.s32.totalorder %s23, 0
      %p110 = por %p108, %p109
      %p111 = scmp.ne.s32.totalorder %s97, %s98
      %p112 = scmp.eq.s32.totalorder %s24, 7
      %p113 = por %p111, %p112
      %p115 = scmp.ne.s32.totalorder %s98, %s114
      %p116 = scmp.eq.s32.totalorder %s24, 0
      %p117 = por %p115, %p116
      %s118 = ssub.s32 %s25, %s37
      %p119 = scmp.eq.s32.totalorder %s118, 0
      %s121 = sadd.s32 %s120, 1
      %s122 = scalar_select %p119, %s120, %s121
      %p125 = pneg %p119
      %p126 = scmp.eq.s32.totalorder %s18, 7
      %p127 = por %p125, %p126
      %p128 = scmp.ne.s32.totalorder %s120, %s123
      %p129 = scmp.eq.s32.totalorder %s18, 0
      %p130 = por %p128, %p129
      %p131 = scmp.ne.s32.totalorder %s120, %s123
      %p132 = scmp.eq.s32.totalorder %s23, 7
      %p133 = por %p131, %p132
      %p134 = scmp.ne.s32.totalorder %s123, %s124
      %p135 = scmp.eq.s32.totalorder %s23, 0
      %p136 = por %p134, %p135
      %p137 = scmp.ne.s32.totalorder %s123, %s124
      %p138 = scmp.eq.s32.totalorder %s24, 7
      %p139 = por %p137, %p138
      %p141 = scmp.ne.s32.totalorder %s124, %s140
      %p142 = scmp.eq.s32.totalorder %s24, 0
      %p143 = por %p141, %p142
      %p144 = scmp.le.s32.totalorder 1, %s18
      %p145 = scmp.lt.s32.totalorder %s18, 9
      %p146 = pnand %p144, %p145
      %p147 = pneg %p146
      // Predicated region
      $region9: #{tpu_custom_call.1} parent=5 // pred_check
        _
      $region10: #{tpu_custom_call.1} parent=5 // pred_check_branch
        %149 = sbr.rel (%p146) target = $region12
      $region11: #{tpu_custom_call.1} parent=5 // pred_region
        %s150 = ssub.s32 %s18, 1
      $region12: #{tpu_custom_call.1} parent=5 // pred_fallthru
        _
      %p151 = scmp.lt.s32.totalorder %s18, 8
      // Predicated region
      $region13: #{tpu_custom_call.1} parent=5 // pred_check
        %p152 = pneg %p151
      $region14: #{tpu_custom_call.1} parent=5 // pred_check_branch
        %154 = sbr.rel (%p152) target = $region16
      $region15: #{tpu_custom_call.1} parent=5 // pred_region
        // Predicated region
        $region17: #{tpu_custom_call.1} parent=15 // pred_check
          %p155 = pneg %p50
        $region18: #{tpu_custom_call.1} parent=15 // pred_check_branch
          %157 = sbr.rel (%p155) target = $region20
        $region19: #{tpu_custom_call.1} parent=15 // pred_region
          %s158 = sand.u32 %s40, 1
          %s159 = scalar_lea.sflag [#allocation4], %s158
          %s160 = sand.u32 %s40, 1
          %s161 = smul.addr %s160, 64
          %s162 = scalar_lea.vmem [#allocation3], %s161
          %s163 = smul.u32 8, %s26
          %165 = vsyncadd %s159, 0
          %s166 = smul.addr %s163, 8
          %s167 = scalar_lea.hbm %s0, %s166
          %s169 = sshll.u32 %s167, 4
          %s170 = int_to_ptr.hbm [resolvable:$true] %s169
          %s171 = sshll.u32 %s162, 4
          %s172 = int_to_ptr.vmem [resolvable:$true] %s171
          %174 = dma.hbm_to_vmem [thread:$0]  %s170, 1024, %s172, %s159
        $region20: #{tpu_custom_call.1} parent=15 // pred_fallthru
          _
        // Predicated region
        $region21: #{tpu_custom_call.1} parent=15 // pred_check
          %p175 = pneg %p78
        $region22: #{tpu_custom_call.1} parent=15 // pred_check_branch
          %177 = sbr.rel (%p175) target = $region24
        $region23: #{tpu_custom_call.1} parent=15 // pred_region
          %s178 = sand.u32 %s18, 1
          %s179 = scalar_lea.sflag [#allocation7], %s178
          %s180 = sand.u32 %s68, 1
          %s181 = smul.addr %s180, 2048
          %s182 = scalar_lea.vmem [#allocation6], %s181
          %s183 = smul.u32 128, %s26
          %s184 = smul.u32 2, %s25
          %186 = vsyncadd %s179, 0
          %s187 = smul.addr %s183, 4
          %s188 = sadd.s32 %s184, %s187
          %s189 = smul.addr %s188, 8
          %s190 = scalar_lea.hbm %s1, %s189
          %s191 = sshll.u32 %s190, 4
          %s192 = int_to_ptr.hbm [resolvable:$true] %s191
          %s193 = sshll.u32 %s182, 4
          %s194 = int_to_ptr.vmem [resolvable:$true] %s193
          %199 = dma.hbm_to_vmem [thread:$0]  %s192, 32768, %s194, %s179, 512, 256, 16
        $region24: #{tpu_custom_call.1} parent=15 // pred_fallthru
          _
        // Predicated region
        $region25: #{tpu_custom_call.1} parent=15 // pred_check
          %p200 = pneg %p104
        $region26: #{tpu_custom_call.1} parent=15 // pred_check_branch
          %202 = sbr.rel (%p200) target = $region28
        $region27: #{tpu_custom_call.1} parent=15 // pred_region
          %s203 = sand.u32 %s18, 1
          %s204 = scalar_lea.sflag [#allocation7], %s203
          %s205 = sand.u32 %s94, 1
          %s206 = smul.addr %s205, 2
          %s207 = scalar_lea.vmem [#allocation8], %s206
          %s208 = smul.u32 2, %s25
          %210 = vsyncadd %s204, 0
          %s211 = scalar_lea.hbm %s2, %s208
          %s213 = sshll.u32 %s211, 4
          %s214 = int_to_ptr.hbm [resolvable:$true] %s213
          %s215 = sshll.u32 %s207, 4
          %s216 = int_to_ptr.vmem [resolvable:$true] %s215
          %218 = dma.hbm_to_vmem [thread:$0]  %s214, 32, %s216, %s204
        $region28: #{tpu_custom_call.1} parent=15 // pred_fallthru
          _
      $region16: #{tpu_custom_call.1} parent=5 // pred_fallthru
        _
      %p219 = scmp.le.s32.totalorder 1, %s18
      %p220 = scmp.lt.s32.totalorder %s18, 9
      %p221 = pnand %p219, %p220
      %p222 = pneg %p221
      // Predicated region
      $region29: #{tpu_custom_call.1} parent=5 // pred_check
        _
      $region30: #{tpu_custom_call.1} parent=5 // pred_check_branch
        %224 = sbr.rel (%p221) target = $region32
      $region31: #{tpu_custom_call.1} parent=5 // pred_region
        %s225 = ssub.s32 %s18, 1
        %s226 = sand.u32 %s43, 1
        %s227 = scalar_lea.sflag [#allocation4], %s226
        %s228 = sand.u32 %s43, 1
        %s229 = smul.addr %s228, 64
        %s230 = scalar_lea.vmem [#allocation3], %s229
        // Predicated region
        $region33: #{tpu_custom_call.1} parent=31 // pred_check
          %p231 = pneg %p56
        $region34: #{tpu_custom_call.1} parent=31 // pred_check_branch
          %233 = sbr.rel (%p231) target = $region36
        $region35: #{tpu_custom_call.1} parent=31 // pred_region
          %235 = dma.done %s227, 1024
        $region36: #{tpu_custom_call.1} parent=31 // pred_fallthru
          _
        %s236 = sand.u32 %s23, 1
        %s237 = scalar_lea.sflag [#allocation7], %s236
        %s238 = sand.u32 %s71, 1
        %s239 = smul.addr %s238, 2048
        %s240 = scalar_lea.vmem [#allocation6], %s239
        // Predicated region
        $region37: #{tpu_custom_call.1} parent=31 // pred_check
          %p241 = pneg %p84
        $region38: #{tpu_custom_call.1} parent=31 // pred_check_branch
          %243 = sbr.rel (%p241) target = $region40
        $region39: #{tpu_custom_call.1} parent=31 // pred_region
          %245 = dma.done %s237, 32768
        $region40: #{tpu_custom_call.1} parent=31 // pred_fallthru
          _
        %s246 = sand.u32 %s23, 1
        %s247 = scalar_lea.sflag [#allocation7], %s246
        %s248 = sand.u32 %s97, 1
        %s249 = smul.addr %s248, 2
        %s250 = scalar_lea.vmem [#allocation8], %s249
        // Predicated region
        $region41: #{tpu_custom_call.1} parent=31 // pred_check
          %p251 = pneg %p110
        $region42: #{tpu_custom_call.1} parent=31 // pred_check_branch
          %253 = sbr.rel (%p251) target = $region44
        $region43: #{tpu_custom_call.1} parent=31 // pred_region
          %255 = dma.done %s247, 32
        $region44: #{tpu_custom_call.1} parent=31 // pred_fallthru
          _
        %s256 = sand.u32 %s43, 1
        %s257 = scalar_lea.sflag [#allocation4], %s256
        %s258 = sand.u32 %s43, 1
        %s259 = smul.addr %s258, 64
        %s260 = scalar_lea.vmem [#allocation3], %s259
        %p261 = pneg %p56
        %p262 = pneg %p53
        %s263 = sand.u32 %s23, 1
        %s264 = scalar_lea.sflag [#allocation7], %s263
        %s265 = sand.u32 %s71, 1
        %s266 = smul.addr %s265, 2048
        %s267 = scalar_lea.vmem [#allocation6], %s266
        %p268 = pneg %p84
        %p269 = pneg %p81
        %s270 = sand.u32 %s23, 1
        %s271 = scalar_lea.sflag [#allocation7], %s270
        %s272 = sand.u32 %s97, 1
        %s273 = smul.addr %s272, 2
        %s274 = scalar_lea.vmem [#allocation8], %s273
        %p275 = pneg %p110
        %p276 = pneg %p107
        %p277 = pneg %p136
        %p278 = pneg %p133
        %s279 = sand.u32 %s123, 1
        %s280 = scalar_lea.sflag [#allocation5], %s279
        %s281 = sand.u32 %s123, 1
        %s282 = smul.addr %s281, 16
        %s283 = scalar_lea.vmem [#allocation9], %s282
        %s284 = smul.u32 8, %s28
        %s285 = smul.u32 128, %s28
        %s286 = smul.u32 2, %s27
        %s287 = smul.u32 2, %s27
        %s288 = smul.u32 2, %s27
        %p289 = scmp.eq.s32.totalorder %s28, 0
        // Predicated region
        $region45: #{tpu_custom_call.1} parent=31 // pred_check
          %p290 = pneg %p289
        $region46: #{tpu_custom_call.1} parent=31 // pred_check_branch
          %292 = sbr.rel (%p290) target = $region48
        $region47: #{tpu_custom_call.1} parent=31 // pred_region
          %293 = vst [vmem:[#allocation2] sm:$0xff] 0.0
          %294 = vst [vmem:[#allocation2 + $0x8] sm:$0xff] 0.0
        $region48: #{tpu_custom_call.1} parent=31 // pred_fallthru
          _
        %v295 = vld [vmem:[#allocation2] sm:$0xff]
        %v296 = vld [vmem:[#allocation2 + $0x8] sm:$0xff]
        %v297 = vld [vmem:[%s230] sm:$0xff]
        %v298 = vld [vmem:[%s230 + $0x8] sm:$0xff]
        %v299 = vld [vmem:[%s230 + $0x10] sm:$0xff]
        %v300 = vld [vmem:[%s230 + $0x18] sm:$0xff]
        %v301 = vld [vmem:[%s230 + $0x20] sm:$0xff]
        %v302 = vld [vmem:[%s230 + $0x28] sm:$0xff]
        %v303 = vld [vmem:[%s230 + $0x30] sm:$0xff]
        %v304 = vld [vmem:[%s230 + $0x38] sm:$0xff]
        %v305 = vld [vmem:[%s240] sm:$0xff]
        %v306 = vld [vmem:[%s240 + $0x8] sm:$0xff]
        %v307 = vld [vmem:[%s240 + $0x10] sm:$0xff]
        %v308 = vld [vmem:[%s240 + $0x18] sm:$0xff]
        %v309 = vld [vmem:[%s240 + $0x20] sm:$0xff]
        %v310 = vld [vmem:[%s240 + $0x28] sm:$0xff]
        %v311 = vld [vmem:[%s240 + $0x30] sm:$0xff]
        %v312 = vld [vmem:[%s240 + $0x38] sm:$0xff]
        %v313 = vld [vmem:[%s240 + $0x40] sm:$0xff]
        %v314 = vld [vmem:[%s240 + $0x48] sm:$0xff]
        %v315 = vld [vmem:[%s240 + $0x50] sm:$0xff]
        %v316 = vld [vmem:[%s240 + $0x58] sm:$0xff]
        %v317 = vld [vmem:[%s240 + $0x60] sm:$0xff]
        %v318 = vld [vmem:[%s240 + $0x68] sm:$0xff]
        %v319 = vld [vmem:[%s240 + $0x70] sm:$0xff]
        %v320 = vld [vmem:[%s240 + $0x78] sm:$0xff]
        %v321 = vld [vmem:[%s240 + $0x80] sm:$0xff]
        %v322 = vld [vmem:[%s240 + $0x88] sm:$0xff]
        %v323 = vld [vmem:[%s240 + $0x90] sm:$0xff]
        %v324 = vld [vmem:[%s240 + $0x98] sm:$0xff]
        %v325 = vld [vmem:[%s240 + $0xa0] sm:$0xff]
        %v326 = vld [vmem:[%s240 + $0xa8] sm:$0xff]
        %v327 = vld [vmem:[%s240 + $0xb0] sm:$0xff]
        %v328 = vld [vmem:[%s240 + $0xb8] sm:$0xff]
        %v329 = vld [vmem:[%s240 + $0xc0] sm:$0xff]
        %v330 = vld [vmem:[%s240 + $0xc8] sm:$0xff]
        %v331 = vld [vmem:[%s240 + $0xd0] sm:$0xff]
        %v332 = vld [vmem:[%s240 + $0xd8] sm:$0xff]
        %v333 = vld [vmem:[%s240 + $0xe0] sm:$0xff]
        %v334 = vld [vmem:[%s240 + $0xe8] sm:$0xff]
        %v335 = vld [vmem:[%s240 + $0xf0] sm:$0xff]
        %v336 = vld [vmem:[%s240 + $0xf8] sm:$0xff]
        %v337 = vld [vmem:[%s240 + $0x100] sm:$0xff]
        %v338 = vld [vmem:[%s240 + $0x108] sm:$0xff]
        %v339 = vld [vmem:[%s240 + $0x110] sm:$0xff]
        %v340 = vld [vmem:[%s240 + $0x118] sm:$0xff]
        %v341 = vld [vmem:[%s240 + $0x120] sm:$0xff]
        %v342 = vld [vmem:[%s240 + $0x128] sm:$0xff]
        %v343 = vld [vmem:[%s240 + $0x130] sm:$0xff]
        %v344 = vld [vmem:[%s240 + $0x138] sm:$0xff]
        %v345 = vld [vmem:[%s240 + $0x140] sm:$0xff]
        %v346 = vld [vmem:[%s240 + $0x148] sm:$0xff]
        %v347 = vld [vmem:[%s240 + $0x150] sm:$0xff]
        %v348 = vld [vmem:[%s240 + $0x158] sm:$0xff]
        %v349 = vld [vmem:[%s240 + $0x160] sm:$0xff]
        %v350 = vld [vmem:[%s240 + $0x168] sm:$0xff]
        %v351 = vld [vmem:[%s240 + $0x170] sm:$0xff]
        %v352 = vld [vmem:[%s240 + $0x178] sm:$0xff]
        %v353 = vld [vmem:[%s240 + $0x180] sm:$0xff]
        %v354 = vld [vmem:[%s240 + $0x188] sm:$0xff]
        %v355 = vld [vmem:[%s240 + $0x190] sm:$0xff]
        %v356 = vld [vmem:[%s240 + $0x198] sm:$0xff]
        %v357 = vld [vmem:[%s240 + $0x1a0] sm:$0xff]
        %v358 = vld [vmem:[%s240 + $0x1a8] sm:$0xff]
        %v359 = vld [vmem:[%s240 + $0x1b0] sm:$0xff]
        %v360 = vld [vmem:[%s240 + $0x1b8] sm:$0xff]
        %v361 = vld [vmem:[%s240 + $0x1c0] sm:$0xff]
        %v362 = vld [vmem:[%s240 + $0x1c8] sm:$0xff]
        %v363 = vld [vmem:[%s240 + $0x1d0] sm:$0xff]
        %v364 = vld [vmem:[%s240 + $0x1d8] sm:$0xff]
        %v365 = vld [vmem:[%s240 + $0x1e0] sm:$0xff]
        %v366 = vld [vmem:[%s240 + $0x1e8] sm:$0xff]
        %v367 = vld [vmem:[%s240 + $0x1f0] sm:$0xff]
        %v368 = vld [vmem:[%s240 + $0x1f8] sm:$0xff]
        %v369 = vld [vmem:[%s240 + $0x200] sm:$0xff]
        %v370 = vld [vmem:[%s240 + $0x208] sm:$0xff]
        %v371 = vld [vmem:[%s240 + $0x210] sm:$0xff]
        %v372 = vld [vmem:[%s240 + $0x218] sm:$0xff]
        %v373 = vld [vmem:[%s240 + $0x220] sm:$0xff]
        %v374 = vld [vmem:[%s240 + $0x228] sm:$0xff]
        %v375 = vld [vmem:[%s240 + $0x230] sm:$0xff]
        %v376 = vld [vmem:[%s240 + $0x238] sm:$0xff]
        %v377 = vld [vmem:[%s240 + $0x240] sm:$0xff]
        %v378 = vld [vmem:[%s240 + $0x248] sm:$0xff]
        %v379 = vld [vmem:[%s240 + $0x250] sm:$0xff]
        %v380 = vld [vmem:[%s240 + $0x258] sm:$0xff]
        %v381 = vld [vmem:[%s240 + $0x260] sm:$0xff]
        %v382 = vld [vmem:[%s240 + $0x268] sm:$0xff]
        %v383 = vld [vmem:[%s240 + $0x270] sm:$0xff]
        %v384 = vld [vmem:[%s240 + $0x278] sm:$0xff]
        %v385 = vld [vmem:[%s240 + $0x280] sm:$0xff]
        %v386 = vld [vmem:[%s240 + $0x288] sm:$0xff]
        %v387 = vld [vmem:[%s240 + $0x290] sm:$0xff]
        %v388 = vld [vmem:[%s240 + $0x298] sm:$0xff]
        %v389 = vld [vmem:[%s240 + $0x2a0] sm:$0xff]
        %v390 = vld [vmem:[%s240 + $0x2a8] sm:$0xff]
        %v391 = vld [vmem:[%s240 + $0x2b0] sm:$0xff]
        %v392 = vld [vmem:[%s240 + $0x2b8] sm:$0xff]
        %v393 = vld [vmem:[%s240 + $0x2c0] sm:$0xff]
        %v394 = vld [vmem:[%s240 + $0x2c8] sm:$0xff]
        %v395 = vld [vmem:[%s240 + $0x2d0] sm:$0xff]
        %v396 = vld [vmem:[%s240 + $0x2d8] sm:$0xff]
        %v397 = vld [vmem:[%s240 + $0x2e0] sm:$0xff]
        %v398 = vld [vmem:[%s240 + $0x2e8] sm:$0xff]
        %v399 = vld [vmem:[%s240 + $0x2f0] sm:$0xff]
        %v400 = vld [vmem:[%s240 + $0x2f8] sm:$0xff]
        %v401 = vld [vmem:[%s240 + $0x300] sm:$0xff]
        %v402 = vld [vmem:[%s240 + $0x308] sm:$0xff]
        %v403 = vld [vmem:[%s240 + $0x310] sm:$0xff]
        %v404 = vld [vmem:[%s240 + $0x318] sm:$0xff]
        %v405 = vld [vmem:[%s240 + $0x320] sm:$0xff]
        %v406 = vld [vmem:[%s240 + $0x328] sm:$0xff]
        %v407 = vld [vmem:[%s240 + $0x330] sm:$0xff]
        %v408 = vld [vmem:[%s240 + $0x338] sm:$0xff]
        %v409 = vld [vmem:[%s240 + $0x340] sm:$0xff]
        %v410 = vld [vmem:[%s240 + $0x348] sm:$0xff]
        %v411 = vld [vmem:[%s240 + $0x350] sm:$0xff]
        %v412 = vld [vmem:[%s240 + $0x358] sm:$0xff]
        %v413 = vld [vmem:[%s240 + $0x360] sm:$0xff]
        %v414 = vld [vmem:[%s240 + $0x368] sm:$0xff]
        %v415 = vld [vmem:[%s240 + $0x370] sm:$0xff]
        %v416 = vld [vmem:[%s240 + $0x378] sm:$0xff]
        %v417 = vld [vmem:[%s240 + $0x380] sm:$0xff]
        %v418 = vld [vmem:[%s240 + $0x388] sm:$0xff]
        %v419 = vld [vmem:[%s240 + $0x390] sm:$0xff]
        %v420 = vld [vmem:[%s240 + $0x398] sm:$0xff]
        %v421 = vld [vmem:[%s240 + $0x3a0] sm:$0xff]
        %v422 = vld [vmem:[%s240 + $0x3a8] sm:$0xff]
        %v423 = vld [vmem:[%s240 + $0x3b0] sm:$0xff]
        %v424 = vld [vmem:[%s240 + $0x3b8] sm:$0xff]
        %v425 = vld [vmem:[%s240 + $0x3c0] sm:$0xff]
        %v426 = vld [vmem:[%s240 + $0x3c8] sm:$0xff]
        %v427 = vld [vmem:[%s240 + $0x3d0] sm:$0xff]
        %v428 = vld [vmem:[%s240 + $0x3d8] sm:$0xff]
        %v429 = vld [vmem:[%s240 + $0x3e0] sm:$0xff]
        %v430 = vld [vmem:[%s240 + $0x3e8] sm:$0xff]
        %v431 = vld [vmem:[%s240 + $0x3f0] sm:$0xff]
        %v432 = vld [vmem:[%s240 + $0x3f8] sm:$0xff]
        %v433 = vld [vmem:[%s240 + $0x400] sm:$0xff]
        %v434 = vld [vmem:[%s240 + $0x408] sm:$0xff]
        %v435 = vld [vmem:[%s240 + $0x410] sm:$0xff]
        %v436 = vld [vmem:[%s240 + $0x418] sm:$0xff]
        %v437 = vld [vmem:[%s240 + $0x420] sm:$0xff]
        %v438 = vld [vmem:[%s240 + $0x428] sm:$0xff]
        %v439 = vld [vmem:[%s240 + $0x430] sm:$0xff]
        %v440 = vld [vmem:[%s240 + $0x438] sm:$0xff]
        %v441 = vld [vmem:[%s240 + $0x440] sm:$0xff]
        %v442 = vld [vmem:[%s240 + $0x448] sm:$0xff]
        %v443 = vld [vmem:[%s240 + $0x450] sm:$0xff]
        %v444 = vld [vmem:[%s240 + $0x458] sm:$0xff]
        %v445 = vld [vmem:[%s240 + $0x460] sm:$0xff]
        %v446 = vld [vmem:[%s240 + $0x468] sm:$0xff]
        %v447 = vld [vmem:[%s240 + $0x470] sm:$0xff]
        %v448 = vld [vmem:[%s240 + $0x478] sm:$0xff]
        %v449 = vld [vmem:[%s240 + $0x480] sm:$0xff]
        %v450 = vld [vmem:[%s240 + $0x488] sm:$0xff]
        %v451 = vld [vmem:[%s240 + $0x490] sm:$0xff]
        %v452 = vld [vmem:[%s240 + $0x498] sm:$0xff]
        %v453 = vld [vmem:[%s240 + $0x4a0] sm:$0xff]
        %v454 = vld [vmem:[%s240 + $0x4a8] sm:$0xff]
        %v455 = vld [vmem:[%s240 + $0x4b0] sm:$0xff]
        %v456 = vld [vmem:[%s240 + $0x4b8] sm:$0xff]
        %v457 = vld [vmem:[%s240 + $0x4c0] sm:$0xff]
        %v458 = vld [vmem:[%s240 + $0x4c8] sm:$0xff]
        %v459 = vld [vmem:[%s240 + $0x4d0] sm:$0xff]
        %v460 = vld [vmem:[%s240 + $0x4d8] sm:$0xff]
        %v461 = vld [vmem:[%s240 + $0x4e0] sm:$0xff]
        %v462 = vld [vmem:[%s240 + $0x4e8] sm:$0xff]
        %v463 = vld [vmem:[%s240 + $0x4f0] sm:$0xff]
        %v464 = vld [vmem:[%s240 + $0x4f8] sm:$0xff]
        %v465 = vld [vmem:[%s240 + $0x500] sm:$0xff]
        %v466 = vld [vmem:[%s240 + $0x508] sm:$0xff]
        %v467 = vld [vmem:[%s240 + $0x510] sm:$0xff]
        %v468 = vld [vmem:[%s240 + $0x518] sm:$0xff]
        %v469 = vld [vmem:[%s240 + $0x520] sm:$0xff]
        %v470 = vld [vmem:[%s240 + $0x528] sm:$0xff]
        %v471 = vld [vmem:[%s240 + $0x530] sm:$0xff]
        %v472 = vld [vmem:[%s240 + $0x538] sm:$0xff]
        %v473 = vld [vmem:[%s240 + $0x540] sm:$0xff]
        %v474 = vld [vmem:[%s240 + $0x548] sm:$0xff]
        %v475 = vld [vmem:[%s240 + $0x550] sm:$0xff]
        %v476 = vld [vmem:[%s240 + $0x558] sm:$0xff]
        %v477 = vld [vmem:[%s240 + $0x560] sm:$0xff]
        %v478 = vld [vmem:[%s240 + $0x568] sm:$0xff]
        %v479 = vld [vmem:[%s240 + $0x570] sm:$0xff]
        %v480 = vld [vmem:[%s240 + $0x578] sm:$0xff]
        %v481 = vld [vmem:[%s240 + $0x580] sm:$0xff]
        %v482 = vld [vmem:[%s240 + $0x588] sm:$0xff]
        %v483 = vld [vmem:[%s240 + $0x590] sm:$0xff]
        %v484 = vld [vmem:[%s240 + $0x598] sm:$0xff]
        %v485 = vld [vmem:[%s240 + $0x5a0] sm:$0xff]
        %v486 = vld [vmem:[%s240 + $0x5a8] sm:$0xff]
        %v487 = vld [vmem:[%s240 + $0x5b0] sm:$0xff]
        %v488 = vld [vmem:[%s240 + $0x5b8] sm:$0xff]
        %v489 = vld [vmem:[%s240 + $0x5c0] sm:$0xff]
        %v490 = vld [vmem:[%s240 + $0x5c8] sm:$0xff]
        %v491 = vld [vmem:[%s240 + $0x5d0] sm:$0xff]
        %v492 = vld [vmem:[%s240 + $0x5d8] sm:$0xff]
        %v493 = vld [vmem:[%s240 + $0x5e0] sm:$0xff]
        %v494 = vld [vmem:[%s240 + $0x5e8] sm:$0xff]
        %v495 = vld [vmem:[%s240 + $0x5f0] sm:$0xff]
        %v496 = vld [vmem:[%s240 + $0x5f8] sm:$0xff]
        %v497 = vld [vmem:[%s240 + $0x600] sm:$0xff]
        %v498 = vld [vmem:[%s240 + $0x608] sm:$0xff]
        %v499 = vld [vmem:[%s240 + $0x610] sm:$0xff]
        %v500 = vld [vmem:[%s240 + $0x618] sm:$0xff]
        %v501 = vld [vmem:[%s240 + $0x620] sm:$0xff]
        %v502 = vld [vmem:[%s240 + $0x628] sm:$0xff]
        %v503 = vld [vmem:[%s240 + $0x630] sm:$0xff]
        %v504 = vld [vmem:[%s240 + $0x638] sm:$0xff]
        %v505 = vld [vmem:[%s240 + $0x640] sm:$0xff]
        %v506 = vld [vmem:[%s240 + $0x648] sm:$0xff]
        %v507 = vld [vmem:[%s240 + $0x650] sm:$0xff]
        %v508 = vld [vmem:[%s240 + $0x658] sm:$0xff]
        %v509 = vld [vmem:[%s240 + $0x660] sm:$0xff]
        %v510 = vld [vmem:[%s240 + $0x668] sm:$0xff]
        %v511 = vld [vmem:[%s240 + $0x670] sm:$0xff]
        %v512 = vld [vmem:[%s240 + $0x678] sm:$0xff]
        %v513 = vld [vmem:[%s240 + $0x680] sm:$0xff]
        %v514 = vld [vmem:[%s240 + $0x688] sm:$0xff]
        %v515 = vld [vmem:[%s240 + $0x690] sm:$0xff]
        %v516 = vld [vmem:[%s240 + $0x698] sm:$0xff]
        %v517 = vld [vmem:[%s240 + $0x6a0] sm:$0xff]
        %v518 = vld [vmem:[%s240 + $0x6a8] sm:$0xff]
        %v519 = vld [vmem:[%s240 + $0x6b0] sm:$0xff]
        %v520 = vld [vmem:[%s240 + $0x6b8] sm:$0xff]
        %v521 = vld [vmem:[%s240 + $0x6c0] sm:$0xff]
        %v522 = vld [vmem:[%s240 + $0x6c8] sm:$0xff]
        %v523 = vld [vmem:[%s240 + $0x6d0] sm:$0xff]
        %v524 = vld [vmem:[%s240 + $0x6d8] sm:$0xff]
        %v525 = vld [vmem:[%s240 + $0x6e0] sm:$0xff]
        %v526 = vld [vmem:[%s240 + $0x6e8] sm:$0xff]
        %v527 = vld [vmem:[%s240 + $0x6f0] sm:$0xff]
        %v528 = vld [vmem:[%s240 + $0x6f8] sm:$0xff]
        %v529 = vld [vmem:[%s240 + $0x700] sm:$0xff]
        %v530 = vld [vmem:[%s240 + $0x708] sm:$0xff]
        %v531 = vld [vmem:[%s240 + $0x710] sm:$0xff]
        %v532 = vld [vmem:[%s240 + $0x718] sm:$0xff]
        %v533 = vld [vmem:[%s240 + $0x720] sm:$0xff]
        %v534 = vld [vmem:[%s240 + $0x728] sm:$0xff]
        %v535 = vld [vmem:[%s240 + $0x730] sm:$0xff]
        %v536 = vld [vmem:[%s240 + $0x738] sm:$0xff]
        %v537 = vld [vmem:[%s240 + $0x740] sm:$0xff]
        %v538 = vld [vmem:[%s240 + $0x748] sm:$0xff]
        %v539 = vld [vmem:[%s240 + $0x750] sm:$0xff]
        %v540 = vld [vmem:[%s240 + $0x758] sm:$0xff]
        %v541 = vld [vmem:[%s240 + $0x760] sm:$0xff]
        %v542 = vld [vmem:[%s240 + $0x768] sm:$0xff]
        %v543 = vld [vmem:[%s240 + $0x770] sm:$0xff]
        %v544 = vld [vmem:[%s240 + $0x778] sm:$0xff]
        %v545 = vld [vmem:[%s240 + $0x780] sm:$0xff]
        %v546 = vld [vmem:[%s240 + $0x788] sm:$0xff]
        %v547 = vld [vmem:[%s240 + $0x790] sm:$0xff]
        %v548 = vld [vmem:[%s240 + $0x798] sm:$0xff]
        %v549 = vld [vmem:[%s240 + $0x7a0] sm:$0xff]
        %v550 = vld [vmem:[%s240 + $0x7a8] sm:$0xff]
        %v551 = vld [vmem:[%s240 + $0x7b0] sm:$0xff]
        %v552 = vld [vmem:[%s240 + $0x7b8] sm:$0xff]
        %v553 = vld [vmem:[%s240 + $0x7c0] sm:$0xff]
        %v554 = vld [vmem:[%s240 + $0x7c8] sm:$0xff]
        %v555 = vld [vmem:[%s240 + $0x7d0] sm:$0xff]
        %v556 = vld [vmem:[%s240 + $0x7d8] sm:$0xff]
        %v557 = vld [vmem:[%s240 + $0x7e0] sm:$0xff]
        %v558 = vld [vmem:[%s240 + $0x7e8] sm:$0xff]
        %v559 = vld [vmem:[%s240 + $0x7f0] sm:$0xff]
        %v560 = vld [vmem:[%s240 + $0x7f8] sm:$0xff]
        %561 = vmatpush.msra.mxu0 %v335
        %562 = vmatpush.msra.mxu0 %v333
        %563 = vmatpush.msra.mxu0 %v331
        %564 = vmatpush.msra.mxu0 %v329
        %565 = vmatpush.msra.mxu0 %v327
        %566 = vmatpush.msra.mxu0 %v325
        %567 = vmatpush.msra.mxu0 %v323
        %568 = vmatpush.msra.mxu0 %v321
        %569 = vmatpush.msra.mxu0 %v319
        %570 = vmatpush.msra.mxu0 %v317
        %571 = vmatpush.msra.mxu0 %v315
        %572 = vmatpush.msra.mxu0 %v313
        %573 = vmatpush.msra.mxu0 %v311
        %574 = vmatpush.msra.mxu0 %v309
        %575 = vmatpush.msra.mxu0 %v307
        %576 = vmatpush.msra.mxu0 %v305
        %577 = vmatmul.f32.gmra.mxu0 %v297
        %v578 = vpop.f32.mrf.mxu0
        %v579 = vadd.f32 0.0, %v578
        %580 = vdwg.mxu0
        %581 = vmatpush.msra.mxu0 %v367
        %582 = vmatpush.msra.mxu0 %v365
        %583 = vmatpush.msra.mxu0 %v363
        %584 = vmatpush.msra.mxu0 %v361
        %585 = vmatpush.msra.mxu0 %v359
        %586 = vmatpush.msra.mxu0 %v357
        %587 = vmatpush.msra.mxu0 %v355
        %588 = vmatpush.msra.mxu0 %v353
        %589 = vmatpush.msra.mxu0 %v351
        %590 = vmatpush.msra.mxu0 %v349
        %591 = vmatpush.msra.mxu0 %v347
        %592 = vmatpush.msra.mxu0 %v345
        %593 = vmatpush.msra.mxu0 %v343
        %594 = vmatpush.msra.mxu0 %v341
        %595 = vmatpush.msra.mxu0 %v339
        %596 = vmatpush.msra.mxu0 %v337
        %597 = vmatmul.f32.gmra.mxu0 %v298
        %v598 = vpop.f32.mrf.mxu0
        %v599 = vadd.f32 %v579, %v598
        %600 = vdwg.mxu0
        %601 = vmatpush.msra.mxu0 %v399
        %602 = vmatpush.msra.mxu0 %v397
        %603 = vmatpush.msra.mxu0 %v395
        %604 = vmatpush.msra.mxu0 %v393
        %605 = vmatpush.msra.mxu0 %v391
        %606 = vmatpush.msra.mxu0 %v389
        %607 = vmatpush.msra.mxu0 %v387
        %608 = vmatpush.msra.mxu0 %v385
        %609 = vmatpush.msra.mxu0 %v383
        %610 = vmatpush.msra.mxu0 %v381
        %611 = vmatpush.msra.mxu0 %v379
        %612 = vmatpush.msra.mxu0 %v377
        %613 = vmatpush.msra.mxu0 %v375
        %614 = vmatpush.msra.mxu0 %v373
        %615 = vmatpush.msra.mxu0 %v371
        %616 = vmatpush.msra.mxu0 %v369
        %617 = vmatmul.f32.gmra.mxu0 %v299
        %v618 = vpop.f32.mrf.mxu0
        %v619 = vadd.f32 %v599, %v618
        %620 = vdwg.mxu0
        %621 = vmatpush.msra.mxu0 %v431
        %622 = vmatpush.msra.mxu0 %v429
        %623 = vmatpush.msra.mxu0 %v427
        %624 = vmatpush.msra.mxu0 %v425
        %625 = vmatpush.msra.mxu0 %v423
        %626 = vmatpush.msra.mxu0 %v421
        %627 = vmatpush.msra.mxu0 %v419
        %628 = vmatpush.msra.mxu0 %v417
        %629 = vmatpush.msra.mxu0 %v415
        %630 = vmatpush.msra.mxu0 %v413
        %631 = vmatpush.msra.mxu0 %v411
        %632 = vmatpush.msra.mxu0 %v409
        %633 = vmatpush.msra.mxu0 %v407
        %634 = vmatpush.msra.mxu0 %v405
        %635 = vmatpush.msra.mxu0 %v403
        %636 = vmatpush.msra.mxu0 %v401
        %637 = vmatmul.f32.gmra.mxu0 %v300
        %v638 = vpop.f32.mrf.mxu0
        %v639 = vadd.f32 %v619, %v638
        %640 = vdwg.mxu0
        %641 = vmatpush.msra.mxu0 %v463
        %642 = vmatpush.msra.mxu0 %v461
        %643 = vmatpush.msra.mxu0 %v459
        %644 = vmatpush.msra.mxu0 %v457
        %645 = vmatpush.msra.mxu0 %v455
        %646 = vmatpush.msra.mxu0 %v453
        %647 = vmatpush.msra.mxu0 %v451
        %648 = vmatpush.msra.mxu0 %v449
        %649 = vmatpush.msra.mxu0 %v447
        %650 = vmatpush.msra.mxu0 %v445
        %651 = vmatpush.msra.mxu0 %v443
        %652 = vmatpush.msra.mxu0 %v441
        %653 = vmatpush.msra.mxu0 %v439
        %654 = vmatpush.msra.mxu0 %v437
        %655 = vmatpush.msra.mxu0 %v435
        %656 = vmatpush.msra.mxu0 %v433
        %657 = vmatmul.f32.gmra.mxu0 %v301
        %v658 = vpop.f32.mrf.mxu0
        %v659 = vadd.f32 %v639, %v658
        %660 = vdwg.mxu0
        %661 = vmatpush.msra.mxu0 %v495
        %662 = vmatpush.msra.mxu0 %v493
        %663 = vmatpush.msra.mxu0 %v491
        %664 = vmatpush.msra.mxu0 %v489
        %665 = vmatpush.msra.mxu0 %v487
        %666 = vmatpush.msra.mxu0 %v485
        %667 = vmatpush.msra.mxu0 %v483
        %668 = vmatpush.msra.mxu0 %v481
        %669 = vmatpush.msra.mxu0 %v479
        %670 = vmatpush.msra.mxu0 %v477
        %671 = vmatpush.msra.mxu0 %v475
        %672 = vmatpush.msra.mxu0 %v473
        %673 = vmatpush.msra.mxu0 %v471
        %674 = vmatpush.msra.mxu0 %v469
        %675 = vmatpush.msra.mxu0 %v467
        %676 = vmatpush.msra.mxu0 %v465
        %677 = vmatmul.f32.gmra.mxu0 %v302
        %v678 = vpop.f32.mrf.mxu0
        %v679 = vadd.f32 %v659, %v678
        %680 = vdwg.mxu0
        %681 = vmatpush.msra.mxu0 %v527
        %682 = vmatpush.msra.mxu0 %v525
        %683 = vmatpush.msra.mxu0 %v523
        %684 = vmatpush.msra.mxu0 %v521
        %685 = vmatpush.msra.mxu0 %v519
        %686 = vmatpush.msra.mxu0 %v517
        %687 = vmatpush.msra.mxu0 %v515
        %688 = vmatpush.msra.mxu0 %v513
        %689 = vmatpush.msra.mxu0 %v511
        %690 = vmatpush.msra.mxu0 %v509
        %691 = vmatpush.msra.mxu0 %v507
        %692 = vmatpush.msra.mxu0 %v505
        %693 = vmatpush.msra.mxu0 %v503
        %694 = vmatpush.msra.mxu0 %v501
        %695 = vmatpush.msra.mxu0 %v499
        %696 = vmatpush.msra.mxu0 %v497
        %697 = vmatmul.f32.gmra.mxu0 %v303
        %v698 = vpop.f32.mrf.mxu0
        %v699 = vadd.f32 %v679, %v698
        %700 = vdwg.mxu0
        %701 = vmatpush.msra.mxu0 %v559
        %702 = vmatpush.msra.mxu0 %v557
        %703 = vmatpush.msra.mxu0 %v555
        %704 = vmatpush.msra.mxu0 %v553
        %705 = vmatpush.msra.mxu0 %v551
        %706 = vmatpush.msra.mxu0 %v549
        %707 = vmatpush.msra.mxu0 %v547
        %708 = vmatpush.msra.mxu0 %v545
        %709 = vmatpush.msra.mxu0 %v543
        %710 = vmatpush.msra.mxu0 %v541
        %711 = vmatpush.msra.mxu0 %v539
        %712 = vmatpush.msra.mxu0 %v537
        %713 = vmatpush.msra.mxu0 %v535
        %714 = vmatpush.msra.mxu0 %v533
        %715 = vmatpush.msra.mxu0 %v531
        %716 = vmatpush.msra.mxu0 %v529
        %717 = vmatmul.f32.gmra.mxu0 %v304
        %v718 = vpop.f32.mrf.mxu0
        %v719 = vadd.f32 %v699, %v718
        %720 = vdwg.mxu0
        %721 = vmatpush.msra.mxu0 %v336
        %722 = vmatpush.msra.mxu0 %v334
        %723 = vmatpush.msra.mxu0 %v332
        %724 = vmatpush.msra.mxu0 %v330
        %725 = vmatpush.msra.mxu0 %v328
        %726 = vmatpush.msra.mxu0 %v326
        %727 = vmatpush.msra.mxu0 %v324
        %728 = vmatpush.msra.mxu0 %v322
        %729 = vmatpush.msra.mxu0 %v320
        %730 = vmatpush.msra.mxu0 %v318
        %731 = vmatpush.msra.mxu0 %v316
        %732 = vmatpush.msra.mxu0 %v314
        %733 = vmatpush.msra.mxu0 %v312
        %734 = vmatpush.msra.mxu0 %v310
        %735 = vmatpush.msra.mxu0 %v308
        %736 = vmatpush.msra.mxu0 %v306
        %737 = vmatmul.f32.gmra.mxu0 %v297
        %v738 = vpop.f32.mrf.mxu0
        %v739 = vadd.f32 0.0, %v738
        %740 = vdwg.mxu0
        %741 = vmatpush.msra.mxu0 %v368
        %742 = vmatpush.msra.mxu0 %v366
        %743 = vmatpush.msra.mxu0 %v364
        %744 = vmatpush.msra.mxu0 %v362
        %745 = vmatpush.msra.mxu0 %v360
        %746 = vmatpush.msra.mxu0 %v358
        %747 = vmatpush.msra.mxu0 %v356
        %748 = vmatpush.msra.mxu0 %v354
        %749 = vmatpush.msra.mxu0 %v352
        %750 = vmatpush.msra.mxu0 %v350
        %751 = vmatpush.msra.mxu0 %v348
        %752 = vmatpush.msra.mxu0 %v346
        %753 = vmatpush.msra.mxu0 %v344
        %754 = vmatpush.msra.mxu0 %v342
        %755 = vmatpush.msra.mxu0 %v340
        %756 = vmatpush.msra.mxu0 %v338
        %757 = vmatmul.f32.gmra.mxu0 %v298
        %v758 = vpop.f32.mrf.mxu0
        %v759 = vadd.f32 %v739, %v758
        %760 = vdwg.mxu0
        %761 = vmatpush.msra.mxu0 %v400
        %762 = vmatpush.msra.mxu0 %v398
        %763 = vmatpush.msra.mxu0 %v396
        %764 = vmatpush.msra.mxu0 %v394
        %765 = vmatpush.msra.mxu0 %v392
        %766 = vmatpush.msra.mxu0 %v390
        %767 = vmatpush.msra.mxu0 %v388
        %768 = vmatpush.msra.mxu0 %v386
        %769 = vmatpush.msra.mxu0 %v384
        %770 = vmatpush.msra.mxu0 %v382
        %771 = vmatpush.msra.mxu0 %v380
        %772 = vmatpush.msra.mxu0 %v378
        %773 = vmatpush.msra.mxu0 %v376
        %774 = vmatpush.msra.mxu0 %v374
        %775 = vmatpush.msra.mxu0 %v372
        %776 = vmatpush.msra.mxu0 %v370
        %777 = vmatmul.f32.gmra.mxu0 %v299
        %v778 = vpop.f32.mrf.mxu0
        %v779 = vadd.f32 %v759, %v778
        %780 = vdwg.mxu0
        %781 = vmatpush.msra.mxu0 %v432
        %782 = vmatpush.msra.mxu0 %v430
        %783 = vmatpush.msra.mxu0 %v428
        %784 = vmatpush.msra.mxu0 %v426
        %785 = vmatpush.msra.mxu0 %v424
        %786 = vmatpush.msra.mxu0 %v422
        %787 = vmatpush.msra.mxu0 %v420
        %788 = vmatpush.msra.mxu0 %v418
        %789 = vmatpush.msra.mxu0 %v416
        %790 = vmatpush.msra.mxu0 %v414
        %791 = vmatpush.msra.mxu0 %v412
        %792 = vmatpush.msra.mxu0 %v410
        %793 = vmatpush.msra.mxu0 %v408
        %794 = vmatpush.msra.mxu0 %v406
        %795 = vmatpush.msra.mxu0 %v404
        %796 = vmatpush.msra.mxu0 %v402
        %797 = vmatmul.f32.gmra.mxu0 %v300
        %v798 = vpop.f32.mrf.mxu0
        %v799 = vadd.f32 %v779, %v798
        %800 = vdwg.mxu0
        %801 = vmatpush.msra.mxu0 %v464
        %802 = vmatpush.msra.mxu0 %v462
        %803 = vmatpush.msra.mxu0 %v460
        %804 = vmatpush.msra.mxu0 %v458
        %805 = vmatpush.msra.mxu0 %v456
        %806 = vmatpush.msra.mxu0 %v454
        %807 = vmatpush.msra.mxu0 %v452
        %808 = vmatpush.msra.mxu0 %v450
        %809 = vmatpush.msra.mxu0 %v448
        %810 = vmatpush.msra.mxu0 %v446
        %811 = vmatpush.msra.mxu0 %v444
        %812 = vmatpush.msra.mxu0 %v442
        %813 = vmatpush.msra.mxu0 %v440
        %814 = vmatpush.msra.mxu0 %v438
        %815 = vmatpush.msra.mxu0 %v436
        %816 = vmatpush.msra.mxu0 %v434
        %817 = vmatmul.f32.gmra.mxu0 %v301
        %v818 = vpop.f32.mrf.mxu0
        %v819 = vadd.f32 %v799, %v818
        %820 = vdwg.mxu0
        %821 = vmatpush.msra.mxu0 %v496
        %822 = vmatpush.msra.mxu0 %v494
        %823 = vmatpush.msra.mxu0 %v492
        %824 = vmatpush.msra.mxu0 %v490
        %825 = vmatpush.msra.mxu0 %v488
        %826 = vmatpush.msra.mxu0 %v486
        %827 = vmatpush.msra.mxu0 %v484
        %828 = vmatpush.msra.mxu0 %v482
        %829 = vmatpush.msra.mxu0 %v480
        %830 = vmatpush.msra.mxu0 %v478
        %831 = vmatpush.msra.mxu0 %v476
        %832 = vmatpush.msra.mxu0 %v474
        %833 = vmatpush.msra.mxu0 %v472
        %834 = vmatpush.msra.mxu0 %v470
        %835 = vmatpush.msra.mxu0 %v468
        %836 = vmatpush.msra.mxu0 %v466
        %837 = vmatmul.f32.gmra.mxu0 %v302
        %v838 = vpop.f32.mrf.mxu0
        %v839 = vadd.f32 %v819, %v838
        %840 = vdwg.mxu0
        %841 = vmatpush.msra.mxu0 %v528
        %842 = vmatpush.msra.mxu0 %v526
        %843 = vmatpush.msra.mxu0 %v524
        %844 = vmatpush.msra.mxu0 %v522
        %845 = vmatpush.msra.mxu0 %v520
        %846 = vmatpush.msra.mxu0 %v518
        %847 = vmatpush.msra.mxu0 %v516
        %848 = vmatpush.msra.mxu0 %v514
        %849 = vmatpush.msra.mxu0 %v512
        %850 = vmatpush.msra.mxu0 %v510
        %851 = vmatpush.msra.mxu0 %v508
        %852 = vmatpush.msra.mxu0 %v506
        %853 = vmatpush.msra.mxu0 %v504
        %854 = vmatpush.msra.mxu0 %v502
        %855 = vmatpush.msra.mxu0 %v500
        %856 = vmatpush.msra.mxu0 %v498
        %857 = vmatmul.f32.gmra.mxu0 %v303
        %v858 = vpop.f32.mrf.mxu0
        %v859 = vadd.f32 %v839, %v858
        %860 = vdwg.mxu0
        %861 = vmatpush.msra.mxu0 %v560
        %862 = vmatpush.msra.mxu0 %v558
        %863 = vmatpush.msra.mxu0 %v556
        %864 = vmatpush.msra.mxu0 %v554
        %865 = vmatpush.msra.mxu0 %v552
        %866 = vmatpush.msra.mxu0 %v550
        %867 = vmatpush.msra.mxu0 %v548
        %868 = vmatpush.msra.mxu0 %v546
        %869 = vmatpush.msra.mxu0 %v544
        %870 = vmatpush.msra.mxu0 %v542
        %871 = vmatpush.msra.mxu0 %v540
        %872 = vmatpush.msra.mxu0 %v538
        %873 = vmatpush.msra.mxu0 %v536
        %874 = vmatpush.msra.mxu0 %v534
        %875 = vmatpush.msra.mxu0 %v532
        %876 = vmatpush.msra.mxu0 %v530
        %877 = vmatmul.f32.gmra.mxu0 %v304
        %v878 = vpop.f32.mrf.mxu0
        %v879 = vadd.f32 %v859, %v878
        %880 = vdwg.mxu0
        %v881 = vadd.f32 %v295, %v719
        %v882 = vadd.f32 %v296, %v879
        %883 = vst [vmem:[#allocation2] sm:$0xff] %v881
        %884 = vst [vmem:[#allocation2 + $0x8] sm:$0xff] %v882
        %p885 = scmp.eq.s32.totalorder %s28, 3
        // Predicated region
        $region49: #{tpu_custom_call.1} parent=31 // pred_check
          %p886 = pneg %p885
        $region50: #{tpu_custom_call.1} parent=31 // pred_check_branch
          %888 = sbr.rel (%p886) target = $region52
        $region51: #{tpu_custom_call.1} parent=31 // pred_region
          %v889 = vld [vmem:[#allocation2] sm:$0xff]
          %v890 = vld [vmem:[#allocation2 + $0x8] sm:$0xff]
          %v891 = vld [vmem:[%s250] sm:$0x3]
          %v893 = vperm.slane %v891, 0
          %v894 = vperm.slane %v891, 1
          %v897 = vadd.f32 %v889, %v893
          %v898 = vadd.f32 %v890, %v894
          %899 = vst [vmem:[%s283] sm:$0xff] %v897
          %900 = vst [vmem:[%s283 + $0x8] sm:$0xff] %v898
        $region52: #{tpu_custom_call.1} parent=31 // pred_fallthru
          _
        %s901 = sand.u32 %s123, 1
        %s902 = scalar_lea.sflag [#allocation5], %s901
        %s903 = sand.u32 %s123, 1
        %s904 = smul.addr %s903, 16
        %s905 = scalar_lea.vmem [#allocation9], %s904
        // Predicated region
        $region53: #{tpu_custom_call.1} parent=31 // pred_check
          %p906 = pneg %p133
        $region54: #{tpu_custom_call.1} parent=31 // pred_check_branch
          %908 = sbr.rel (%p906) target = $region56
        $region55: #{tpu_custom_call.1} parent=31 // pred_region
          %s909 = smul.u32 2, %s27
          %911 = vsyncadd %s902, 0
          %s912 = smul.addr %s909, 8
          %s913 = scalar_lea.hbm %s3, %s912
          %s915 = sshll.u32 %s905, 4
          %s916 = int_to_ptr.vmem [resolvable:$true] %s915
          %s917 = sshll.u32 %s913, 4
          %s918 = int_to_ptr.hbm [resolvable:$true] %s917
          %920 = dma.vmem_to_hbm [thread:$0]  %s916, 256, %s918, %s902
        $region56: #{tpu_custom_call.1} parent=31 // pred_fallthru
          _
      $region32: #{tpu_custom_call.1} parent=5 // pred_fallthru
        _
      %p921 = scmp.le.s32.totalorder 2, %s18
      // Predicated region
      $region57: #{tpu_custom_call.1} parent=5 // pred_check
        %p922 = pneg %p921
      $region58: #{tpu_custom_call.1} parent=5 // pred_check_branch
        %924 = sbr.rel (%p922) target = $region60
      $region59: #{tpu_custom_call.1} parent=5 // pred_region
        %s925 = ssub.s32 %s18, 2
        // Predicated region
        $region61: #{tpu_custom_call.1} parent=59 // pred_check
          %p926 = pneg %p139
        $region62: #{tpu_custom_call.1} parent=59 // pred_check_branch
          %928 = sbr.rel (%p926) target = $region64
        $region63: #{tpu_custom_call.1} parent=59 // pred_region
          %s929 = sand.u32 %s124, 1
          %s930 = scalar_lea.sflag [#allocation5], %s929
          %s931 = sand.u32 %s124, 1
          %s932 = smul.addr %s931, 16
          %s933 = scalar_lea.vmem [#allocation9], %s932
          %935 = dma.done %s930, 256
        $region64: #{tpu_custom_call.1} parent=59 // pred_fallthru
          _
      $region60: #{tpu_custom_call.1} parent=5 // pred_fallthru
        _
    $region6: #{tpu_custom_call.1} parent=1 // loop_footer
      %s22 = sadd.s32 1, %s18
    $region7: #{tpu_custom_call.1} parent=1 // loop_footer_branch
      %17 = sbr.rel target = $region3
    $region8: #{tpu_custom_call.1} parent=1 // loop_exit
      _
    %936 = vsyncpa [#allocation4], 1
    %s937 = scalar_lea.sflag [#allocation4], 1
    %938 = vsyncpa %s937, 1
    %939 = vsyncpa [#allocation7], 1
    %s940 = scalar_lea.sflag [#allocation7], 1
    %941 = vsyncpa %s940, 1
    %942 = vsyncpa [#allocation5], 1
    %s943 = scalar_lea.sflag [#allocation5], 1
    %944 = vsyncpa %s943, 1

</llo_original>
